<compile_context>
chip_gen: v6e
topology: v6e:2x2x1
jax: 0.10.0
libtpu: 0.0.40
codegen_flags: <defaults>
</compile_context>

<pallas_src>
import functools

import jax
import jax.numpy as jnp
from jax.experimental import pallas as pl
from jax.experimental.pallas import tpu as pltpu

_NEG_LARGE = -1e30
_LANES = 128
_SUBLANES = 8


def _round_up(v, m):
    return ((v + m - 1) // m) * m


def _tpu_generation():
    try:
        kind = jax.devices()[0].device_kind.lower()
    except Exception:
        return "unknown"
    if "v7" in kind or "7x" in kind:
        return "v7x"
    if "v6" in kind:
        return "v6"
    if "v5" in kind:
        return "v5"
    return "unknown"


def _jailbreak_ce_kernel(x_ref, labels_ref, w_ref, b_ref, out_ref, pooled_ref, *,
                         n_valid, tile_n):
    """One (batch-block i, pool-chunk g) grid step.

    x_ref:      [tile_n, tile_g, L]   token-feature chunk (f32 or bf16)
    labels_ref: [tile_n, 1]           int32 class ids
    w_ref:      [L, C_PAD]            f32 head weight, pre-scaled by 1/S, zero-padded cols
    b_ref:      [1, C_PAD]            f32 head bias, padded cols = -1e30
    out_ref:    [1, 8, 128]           f32 per-batch-block partial loss sum (dense store)
    pooled_ref: [tile_n, L]           f32 pooled-token accumulator (scratch)
    """
    i = pl.program_id(0)
    g = pl.program_id(1)
    num_g = pl.num_programs(1)

    @pl.when(g == 0)
    def _():
        pooled_ref[...] = jnp.zeros_like(pooled_ref)

    # f32-accumulating reduction over the token-chunk axis; avoids materializing
    # an f32 copy of the whole (possibly bf16) x tile.
    pooled_ref[...] += jnp.sum(x_ref[...], axis=1, dtype=jnp.float32)

    @pl.when(g == num_g - 1)
    def _():
        pooled = pooled_ref[...]                                           # [tile_n, L]
        # sentence_embedding == class logits (lane-dense C_PAD).  All f32 so the
        # -1e30 padded-column bias stays finite and vanishes from logsumexp.
        logits = jnp.dot(pooled, w_ref[...],
                         preferred_element_type=jnp.float32) + b_ref[...]  # [tile_n, C_PAD]

        m = jnp.max(logits, axis=-1, keepdims=True)
        lse = jnp.log(jnp.sum(jnp.exp(logits - m), axis=-1, keepdims=True)) + m

        labels = labels_ref[...]                                           # [tile_n, 1]
        cls_ids = jax.lax.broadcasted_iota(jnp.int32, logits.shape, 1)
        onehot = (cls_ids == labels).astype(jnp.float32)                   # 0 on padded cols
        target = jnp.sum(logits * onehot, axis=-1, keepdims=True)          # [tile_n, 1]

        per_example = lse - target                                         # [tile_n, 1]

        # x is NOT padded host-side: the ragged last batch block holds unspecified
        # values.  Mask those rows strictly BEFORE the reduce.
        row_ids = i * tile_n + jax.lax.broadcasted_iota(jnp.int32, per_example.shape, 0)
        per_example = jnp.where(row_ids < n_valid, per_example, 0.0)

        # Lane + sublane dense (unmasked) store of the partial sum.
        out_ref[...] = jnp.full(out_ref.shape, jnp.sum(per_example), dtype=jnp.float32)


def jailbreak_classification_loss(x, labels, w, b, *, tile_n=None, tile_g=None):
    """x: [N, S, H] float, labels: [N] int, w: [H, C], b: [C] -> scalar f32 CE loss."""
    n, s, h = x.shape
    c = w.shape[-1]
    itemsize = jnp.dtype(x.dtype).itemsize
    w_scaled = w.astype(jnp.float32) / s          # fold the 1/S mean-pool scale

    # ---- lane-dense x layout -------------------------------------------------
    if h % _LANES == 0:
        x3, g_total, l_dim = x, s, h              # already lane-dense
        w_rows = w_scaled
    elif (_LANES % h == 0) and ((s * h) % _LANES == 0):
        # Pack 128/H token-columns per lane row; tile the head rows to match so
        # logits = sum_l reduced[:, l] * w[l % H, :] reproduces mean-pool @ w.
        g_total, l_dim = (s * h) // _LANES, _LANES
        x3 = x.reshape(n, g_total, l_dim)         # contiguous reshape: free in HBM
        w_rows = jnp.tile(w_scaled, (_LANES // h, 1))
    else:
        # Fallback: correct, but lane-masked loads / padded VMEM tiles.
        x3, g_total, l_dim = x, s, h
        w_rows = w_scaled
    l_pad = _round_up(l_dim, _LANES)

    # ---- lane-dense head: pad class dim to 128 -------------------------------
    # NOTE: out-of-range labels silently give target=0 (loss = lse) instead of
    # erroring like torch CrossEntropyLoss.
    c_pad = _round_up(c, _LANES)
    w_p = jnp.zeros((l_dim, c_pad), jnp.float32).at[:, :c].set(w_rows)
    b_p = jnp.full((1, c_pad), _NEG_LARGE, jnp.float32).at[0, :c].set(
        b.astype(jnp.float32))

    labels2d = labels.astype(jnp.int32).reshape(n, 1)   # no batch padding needed

    # ---- generation-aware VMEM budgeting -------------------------------------
    gen = _tpu_generation()
    if gen in ("v5", "v6"):                       # 128 MiB physical VMEM
        x_budget, vmem_limit = 64 * 1024 * 1024, 100 * 1024 * 1024
    else:                                         # v7x (64 MiB) / unknown: conservative
        x_budget, vmem_limit = 24 * 1024 * 1024, 48 * 1024 * 1024

    slice_bytes = l_pad * itemsize                              # one (row, g-step) slice
    per_row_fixed = ((l_pad + 6 * c_pad) * 4                    # pooled acc + CE temps
                     + 2 * _LANES * 4)                          # labels tile, 2 buffers
    budget = max(x_budget - 2 * l_pad * c_pad * 4 - (1 << 20),  # resident head + headroom
                 2 * 1024 * 1024)

    def _rows_for(tg):
        return budget // (2 * tg * slice_bytes + per_row_fixed)

    # tile_g: divisor of g_total (full extent, or a multiple of 8 for dense blocks)
    valid_tg = [d for d in range(g_total, 0, -1)
                if g_total % d == 0 and (d == g_total or d % _SUBLANES == 0)]
    if tile_g is None:
        tile_g = valid_tg[-1]                     # smallest valid as a last resort
        for d in valid_tg:                        # descending: largest that fits >= 8 rows
            if _rows_for(d) >= _SUBLANES:
                tile_g = d
                break
    elif tile_g not in valid_tg:
        raise ValueError(f"tile_g={tile_g} must divide {g_total} and be a multiple "
                         f"of {_SUBLANES} (or the full extent)")
    num_g = g_total // tile_g

    if tile_n is None:
        tile_n = max(_SUBLANES, (_rows_for(tile_g) // _SUBLANES) * _SUBLANES)
        tile_n = min(tile_n, _round_up(n, _SUBLANES))
        if gen == "v7x":
            # keep >= 2 batch blocks so both TensorCores get work
            tile_n = min(tile_n, _round_up(pl.cdiv(n, 2), _SUBLANES))
    tile_n = max(_SUBLANES, _round_up(tile_n, _SUBLANES))
    num_blocks = pl.cdiv(n, tile_n)

    kernel = functools.partial(_jailbreak_ce_kernel, n_valid=n, tile_n=tile_n)

    cost = pl.CostEstimate(
        flops=n * g_total * l_pad + 2 * n * l_pad * c_pad + 6 * n * c_pad,
        transcendentals=n * (c_pad + 1),
        bytes_accessed=(x3.size * itemsize + n * 4 + w_p.size * 4 + b_p.size * 4
                        + num_blocks * _SUBLANES * _LANES * 4),
    )

    partial = pl.pallas_call(
        kernel,
        out_shape=jax.ShapeDtypeStruct((num_blocks, _SUBLANES, _LANES), jnp.float32),
        grid_spec=pltpu.PrefetchScalarGridSpec(
            num_scalar_prefetch=0,
            grid=(num_blocks, num_g),
            in_specs=[
                pl.BlockSpec((tile_n, tile_g, l_dim), lambda i, g: (i, g, 0)),  # x (pipelined)
                pl.BlockSpec((tile_n, 1), lambda i, g: (i, 0)),                 # labels
                pl.BlockSpec((l_dim, c_pad), lambda i, g: (0, 0)),              # head weight
                pl.BlockSpec((1, c_pad), lambda i, g: (0, 0)),                  # head bias
            ],
            out_specs=pl.BlockSpec((1, _SUBLANES, _LANES), lambda i, g: (i, 0, 0)),
            scratch_shapes=[pltpu.VMEM((tile_n, l_dim), jnp.float32)],
        ),
        compiler_params=pltpu.CompilerParams(
            dimension_semantics=("parallel", "arbitrary"),   # batch across TCs on v7x
            vmem_limit_bytes=vmem_limit,
        ),
        cost_estimate=cost,
    )(x3, labels2d, w_p, b_p)

    # Final mean reduction over per-block partial sums (tiny; plain JAX).
    return jnp.sum(partial[:, 0, 0]) / n


def reference_loss(x, labels, w, b):
    pooled = jnp.mean(x.astype(jnp.float32), axis=1)
    logits = pooled @ w.astype(jnp.float32) + b.astype(jnp.float32)
    logp = jax.nn.log_softmax(logits, axis=-1)
    return -jnp.mean(jnp.take_along_axis(
        logp, labels[:, None].astype(jnp.int32), axis=-1))


if __name__ == "__main__":
    # N sentences, S tokens per sentence, H hidden dim, C classes.
    # N deliberately NOT a multiple of tile_n to exercise the (unpadded) ragged
    # last batch block + in-kernel tail masking.
    N, S, H, C = 13, 64, 32, 2

    key = jax.random.PRNGKey(0)
    kx, kw, kb, kl = jax.random.split(key, 4)
    x = jax.random.normal(kx, (N, S, H), dtype=jnp.float32)
    w = jax.random.normal(kw, (H, C), dtype=jnp.float32) * 0.1
    b = jax.random.normal(kb, (C,), dtype=jnp.float32) * 0.01
    labels = jax.random.randint(kl, (N,), 0, C, dtype=jnp.int32)

    ref = jax.block_until_ready(reference_loss(x, labels, w, b))

    # 1) auto-tiled path (generation-aware budgets)
    loss_auto = jax.block_until_ready(jailbreak_classification_loss(x, labels, w, b))
    assert jnp.allclose(loss_auto, ref, atol=1e-5, rtol=1e-5), (loss_auto, ref)

    # 2) forced small tiles: 2 batch blocks (ragged tail) x 2 pool chunks
    #    (exercises the pipeline, the accumulator scratch and the tail mask)
    loss_tiled = jax.block_until_ready(
        jailbreak_classification_loss(x, labels, w, b, tile_n=8, tile_g=8))
    assert jnp.allclose(loss_tiled, ref, atol=1e-5, rtol=1e-5), (loss_tiled, ref)

    print("KERNEL_OK")
</pallas_src>

<mosaic_0001>
module attributes {stable_mosaic.version = 11 : i64} {
  func.func @_jailbreak_ce_kernel(%arg0: i32, %arg1: i32, %arg2: memref<16x16x128xf32, #tpu.memory_space<vmem>>, %arg3: memref<16x1xi32, #tpu.memory_space<vmem>>, %arg4: memref<128x128xf32, #tpu.memory_space<vmem>>, %arg5: memref<1x128xf32, #tpu.memory_space<vmem>>, %arg6: memref<1x8x128xf32, #tpu.memory_space<vmem>>, %arg7: memref<16x128xf32, #tpu.memory_space<vmem>>) attributes {dimension_semantics = [#tpu.dimension_semantics<parallel>, #tpu.dimension_semantics<arbitrary>], iteration_bounds = array<i64: 1, 1>, scalar_prefetch = 0 : i64, scratch_operands = 1 : i64, tpu.core_type = #tpu.core_type<tc>, window_params = [{transform_indices = @transform_0, window_bounds = array<i64: 16, 16, 128>}, {transform_indices = @transform_1, window_bounds = array<i64: 16, 1>}, {pipeline_mode = #tpu.pipeline_mode<synchronous>, transform_indices = @transform_2, window_bounds = array<i64: 128, 128>}, {pipeline_mode = #tpu.pipeline_mode<synchronous>, transform_indices = @transform_3, window_bounds = array<i64: 1, 128>}, {transform_indices = @transform_4, window_bounds = array<i64: 1, 8, 128>}]} {
    %c0_i32 = arith.constant 0 : i32
    %0 = arith.cmpi eq, %arg1, %c0_i32 : i32
    %1 = arith.extui %0 : i1 to i32
    %c0_i32_0 = arith.constant 0 : i32
    %2 = arith.cmpi ne, %1, %c0_i32_0 : i32
    scf.if %2 {
      %cst_9 = arith.constant 0.000000e+00 : f32
      %11 = vector.broadcast %cst_9 : f32 to vector<16x128xf32>
      %c0_10 = arith.constant 0 : index
      %c0_11 = arith.constant 0 : index
      %12 = vector.load %arg7[%c0_10, %c0_11] : memref<16x128xf32, #tpu.memory_space<vmem>>, vector<16x128xf32>
      tpu.vector_store %arg7[%c0_10, %c0_11], %11 {strides = array<i32>} : memref<16x128xf32, #tpu.memory_space<vmem>>, vector<16x128xf32>,
    } else {
    }
    %c0 = arith.constant 0 : index
    %c0_1 = arith.constant 0 : index
    %3 = vector.load %arg7[%c0, %c0_1] : memref<16x128xf32, #tpu.memory_space<vmem>>, vector<16x128xf32>
    %c0_2 = arith.constant 0 : index
    %c0_3 = arith.constant 0 : index
    %c0_4 = arith.constant 0 : index
    %4 = vector.load %arg2[%c0_2, %c0_3, %c0_4] : memref<16x16x128xf32, #tpu.memory_space<vmem>>, vector<16x16x128xf32>
    %cst = arith.constant dense<0.000000e+00> : vector<16x128xf32>
    %5 = vector.multi_reduction <add>, %4, %cst [1] : vector<16x16x128xf32> to vector<16x128xf32>
    %6 = arith.addf %3, %5 : vector<16x128xf32>
    %c0_5 = arith.constant 0 : index
    %c0_6 = arith.constant 0 : index
    %7 = vector.load %arg7[%c0_5, %c0_6] : memref<16x128xf32, #tpu.memory_space<vmem>>, vector<16x128xf32>
    tpu.vector_store %arg7[%c0_5, %c0_6], %6 {strides = array<i32>} : memref<16x128xf32, #tpu.memory_space<vmem>>, vector<16x128xf32>,
    %c0_i32_7 = arith.constant 0 : i32
    %8 = arith.cmpi eq, %arg1, %c0_i32_7 : i32
    %9 = arith.extui %8 : i1 to i32
    %c0_i32_8 = arith.constant 0 : i32
    %10 = arith.cmpi ne, %9, %c0_i32_8 : i32
    scf.if %10 {
      %c0_9 = arith.constant 0 : index
      %c0_10 = arith.constant 0 : index
      %11 = vector.load %arg7[%c0_9, %c0_10] : memref<16x128xf32, #tpu.memory_space<vmem>>, vector<16x128xf32>
      %c0_11 = arith.constant 0 : index
      %c0_12 = arith.constant 0 : index
      %12 = vector.load %arg4[%c0_11, %c0_12] : memref<128x128xf32, #tpu.memory_space<vmem>>, vector<128x128xf32>
      %cst_13 = arith.constant dense<0.000000e+00> : vector<16x128xf32>
      %13 = tpu.matmul %11, %12, %cst_13 {dimension_numbers = #tpu.dot_dimension_numbers<[1], [0], [0], [1], [0, 0, 1, 1], [], []>} : vector<16x128xf32>, vector<128x128xf32>, vector<16x128xf32> -> vector<16x128xf32>
      %c0_14 = arith.constant 0 : index
      %c0_15 = arith.constant 0 : index
      %14 = vector.load %arg5[%c0_14, %c0_15] : memref<1x128xf32, #tpu.memory_space<vmem>>, vector<1x128xf32>
      %15 = vector.broadcast %14 : vector<1x128xf32> to vector<16x128xf32>
      %16 = arith.addf %13, %15 : vector<16x128xf32>
      %cst_16 = arith.constant dense<0xFF800000> : vector<16xf32>
      %17 = vector.multi_reduction <maximumf>, %16, %cst_16 [1] : vector<16x128xf32> to vector<16xf32>
      %18 = vector.shape_cast %17 : vector<16xf32> to vector<16x1xf32>
      %19 = vector.broadcast %18 : vector<16x1xf32> to vector<16x128xf32>
      %20 = arith.subf %16, %19 : vector<16x128xf32>
      %21 = math.exp %20 : vector<16x128xf32>
      %cst_17 = arith.constant dense<0.000000e+00> : vector<16xf32>
      %22 = vector.multi_reduction <add>, %21, %cst_17 [1] : vector<16x128xf32> to vector<16xf32>
      %23 = vector.shape_cast %22 : vector<16xf32> to vector<16x1xf32>
      %24 = math.log %23 : vector<16x1xf32>
      %25 = arith.addf %24, %18 : vector<16x1xf32>
      %c0_18 = arith.constant 0 : index
      %c0_19 = arith.constant 0 : index
      %26 = vector.load %arg3[%c0_18, %c0_19] : memref<16x1xi32, #tpu.memory_space<vmem>>, vector<16x1xi32>
      %27 = tpu.iota {dimensions = array<i32: 1>} : vector<16x128xi32>
      %28 = vector.broadcast %26 : vector<16x1xi32> to vector<16x128xi32>
      %29 = arith.cmpi eq, %27, %28 : vector<16x128xi32>
      %30 = arith.extui %29 : vector<16x128xi1> to vector<16x128xi32>
      %31 = arith.sitofp %30 : vector<16x128xi32> to vector<16x128xf32>
      %32 = arith.mulf %16, %31 : vector<16x128xf32>
      %cst_20 = arith.constant dense<0.000000e+00> : vector<16xf32>
      %33 = vector.multi_reduction <add>, %32, %cst_20 [1] : vector<16x128xf32> to vector<16xf32>
      %34 = vector.shape_cast %33 : vector<16xf32> to vector<16x1xf32>
      %35 = arith.subf %25, %34 : vector<16x1xf32>
      %c16_i32 = arith.constant 16 : i32
      %36 = arith.muli %arg0, %c16_i32 : i32
      %37 = tpu.iota {dimensions = array<i32: 0>} : vector<16x1xi32>
      %38 = vector.broadcast %36 : i32 to vector<16x1xi32>
      %39 = arith.addi %38, %37 : vector<16x1xi32>
      %c13_i32 = arith.constant 13 : i32
      %40 = vector.broadcast %c13_i32 : i32 to vector<16x1xi32>
      %41 = arith.cmpi slt, %39, %40 : vector<16x1xi32>
      %cst_21 = arith.constant 0.000000e+00 : f32
      %42 = vector.broadcast %cst_21 : f32 to vector<16x1xf32>
      %43 = arith.select %41, %35, %42 : vector<16x1xi1>, vector<16x1xf32>
      %44 = vector.shape_cast %43 : vector<16x1xf32> to vector<1x16x1xf32>
      %cst_22 = arith.constant dense<0.000000e+00> : vector<1xf32>
      %45 = vector.multi_reduction <add>, %44, %cst_22 [1, 2] : vector<1x16x1xf32> to vector<1xf32>
      %46 = vector.shape_cast %45 : vector<1xf32> to vector<1x1x1xf32>
      %47 = vector.extract %46[0, 0, 0] : f32 from vector<1x1x1xf32>
      %48 = vector.broadcast %47 : f32 to vector<1x8x128xf32>
      %c0_23 = arith.constant 0 : index
      %c0_24 = arith.constant 0 : index
      %c0_25 = arith.constant 0 : index
      %49 = vector.load %arg6[%c0_23, %c0_24, %c0_25] : memref<1x8x128xf32, #tpu.memory_space<vmem>>, vector<1x8x128xf32>
      tpu.vector_store %arg6[%c0_23, %c0_24, %c0_25], %48 {strides = array<i32>} : memref<1x8x128xf32, #tpu.memory_space<vmem>>, vector<1x8x128xf32>,
    } else {
    }
    return
  }
  func.func @transform_0(%arg0: i32, %arg1: i32) -> (i32, i32, i32) {
    %c0_i32 = arith.constant 0 : i32
    %c0_i32_0 = arith.constant 0 : i32
    return %arg0, %arg1, %c0_i32 : i32, i32, i32
  }
  func.func @transform_1(%arg0: i32, %arg1: i32) -> (i32, i32) {
    %c0_i32 = arith.constant 0 : i32
    %c0_i32_0 = arith.constant 0 : i32
    return %arg0, %c0_i32 : i32, i32
  }
  func.func @transform_2(%arg0: i32, %arg1: i32) -> (i32, i32) {
    %c0_i32 = arith.constant 0 : i32
    %c0_i32_0 = arith.constant 0 : i32
    %c0_i32_1 = arith.constant 0 : i32
    return %c0_i32, %c0_i32_0 : i32, i32
  }
  func.func @transform_3(%arg0: i32, %arg1: i32) -> (i32, i32) {
    %c0_i32 = arith.constant 0 : i32
    %c0_i32_0 = arith.constant 0 : i32
    %c0_i32_1 = arith.constant 0 : i32
    return %c0_i32, %c0_i32_0 : i32, i32
  }
  func.func @transform_4(%arg0: i32, %arg1: i32) -> (i32, i32, i32) {
    %c0_i32 = arith.constant 0 : i32
    %c0_i32_0 = arith.constant 0 : i32
    %c0_i32_1 = arith.constant 0 : i32
    return %arg0, %c0_i32, %c0_i32_0 : i32, i32, i32
  }
}

</mosaic_0001>

<llo_original>
// kernel: tpu_custom_call.1
$region0: #{tpu_custom_call.1}
  #allocation0 [shape = 'u32[]', space=smem, size = 0x4, offset = 0x4, fixed_abs, tag = 'smem constant byte address 0x4 - core index']
  #allocation1 [shape = 'u32[144,128]{1,0:T(1,128)}', space=vmem, size = 0x12000, scoped, tag = 'internal scratch']
  #allocation2 [shape = 'f32[16,128]{1,0:T(8,128)}', space=vmem, size = 0x2000, scoped, tag = 'scratch operand']
  %s0 = inlined_call_operand.hbm [shape: f32[13,16,128], index: 0, kind: input, shape index: {}]
  %s1 = inlined_call_operand.vmem [shape: s32[13,1], index: 1, kind: input, shape index: {}]
  %s2 = inlined_call_operand.hbm [shape: f32[128,128], index: 2, kind: input, shape index: {}]
  %s3 = inlined_call_operand.vmem [shape: f32[1,128], index: 3, kind: input, shape index: {}]
  %s4 = inlined_call_operand.hbm [shape: f32[1,8,128], index: 4, kind: output, shape index: {}]
  %s5 = sld [smem:[#allocation0]]
  $region42: #{tpu_custom_call.1} parent=0
    _
  %s7 = ssub.s32 1, %s5
  %s8 = scalar_select 0, %s7, %s5
  $region1: #{tpu_custom_call.1} parent=0
    #allocation3 [shape = 'u8[131072]{0}', space=vmem, size = 0x20000, scoped, tag = 'input window, operand 0, single buffered']
    #allocation4 [shape = 's32[1]{0}', space=sflag, size = 0x4, scoped, tag = 'scoped memory for tpu_custom_call.1']
    #allocation5 [shape = 's32[1]{0}', space=sflag, size = 0x4, scoped, tag = 'scoped memory for tpu_custom_call.1']
    #allocation6 [shape = 'u8[65536]{0}', space=vmem, size = 0x10000, scoped, tag = 'input window, operand 2, single buffered']
    #allocation7 [shape = 's32[1]{0}', space=sflag, size = 0x4, scoped, tag = 'scoped memory for tpu_custom_call.1']
    #allocation8 [shape = 'u8[4096]{0}', space=vmem, size = 0x1000, scoped, tag = 'output window, operand 0, single buffered']
    %9 = vsyncpa [#allocation4], 0
    %10 = vsyncpa [#allocation7], 0
    %11 = vsyncpa [#allocation5], 0
    // Predicated region
    $region2: #{tpu_custom_call.1} parent=1 // pred_check
      _
    $region3: #{tpu_custom_call.1} parent=1 // pred_check_branch
      %13 = sbr.rel (0) target = $region5
    $region4: #{tpu_custom_call.1} parent=1 // pred_region
      %s15 = ssub.s32 4096, 3328
      %16 = vsyncadd [#allocation4], %s15
      %s17 = sshll.u32 [#allocation3], 4
      %s18 = int_to_ptr.vmem [resolvable:$true] %s17
      %23 = dma.hbm_to_vmem [thread:$0]  %s0, 3328, %s18, [#allocation4], 128, 128, 8
    $region5: #{tpu_custom_call.1} parent=1 // pred_fallthru
      _
    // Predicated region
    $region6: #{tpu_custom_call.1} parent=1 // pred_check
      _
    $region7: #{tpu_custom_call.1} parent=1 // pred_check_branch
      %25 = sbr.rel (0) target = $region9
    $region8: #{tpu_custom_call.1} parent=1 // pred_region
      _
    $region9: #{tpu_custom_call.1} parent=1 // pred_fallthru
      _
    // Predicated region
    $region10: #{tpu_custom_call.1} parent=1 // pred_check
      _
    $region11: #{tpu_custom_call.1} parent=1 // pred_check_branch
      %27 = sbr.rel (0) target = $region13
    $region12: #{tpu_custom_call.1} parent=1 // pred_region
      %s29 = ssub.s32 2048, 2048
      %30 = vsyncadd [#allocation7], %s29
      %s31 = sshll.u32 [#allocation6], 4
      %s32 = int_to_ptr.vmem [resolvable:$true] %s31
      %37 = dma.hbm_to_vmem [thread:$0]  %s2, 2048, %s32, [#allocation7], 128, 128, 8
    $region13: #{tpu_custom_call.1} parent=1 // pred_fallthru
      _
    // Predicated region
    $region14: #{tpu_custom_call.1} parent=1 // pred_check
      _
    $region15: #{tpu_custom_call.1} parent=1 // pred_check_branch
      %39 = sbr.rel (0) target = $region17
    $region16: #{tpu_custom_call.1} parent=1 // pred_region
      _
    $region17: #{tpu_custom_call.1} parent=1 // pred_fallthru
      _
    // Predicated region
    $region18: #{tpu_custom_call.1} parent=1 // pred_check
      _
    $region19: #{tpu_custom_call.1} parent=1 // pred_check_branch
      %41 = sbr.rel (0) target = $region21
    $region20: #{tpu_custom_call.1} parent=1 // pred_region
      %42 = dma.done [#allocation4], 4096
    $region21: #{tpu_custom_call.1} parent=1 // pred_fallthru
      _
    // Predicated region
    $region22: #{tpu_custom_call.1} parent=1 // pred_check
      _
    $region23: #{tpu_custom_call.1} parent=1 // pred_check_branch
      %44 = sbr.rel (0) target = $region25
    $region24: #{tpu_custom_call.1} parent=1 // pred_region
      %45 = dma.done [#allocation7], 2048
    $region25: #{tpu_custom_call.1} parent=1 // pred_fallthru
      _
    %p46 = scmp.eq.s32.totalorder 0, 0
    // Predicated region
    $region26: #{tpu_custom_call.1} parent=1 // pred_check
      %p47 = pneg %p46
    $region27: #{tpu_custom_call.1} parent=1 // pred_check_branch
      %49 = sbr.rel (%p47) target = $region29
    $region28: #{tpu_custom_call.1} parent=1 // pred_region
      %50 = vst [vmem:[#allocation2] sm:$0xff] 0.0
      %51 = vst [vmem:[#allocation2 + $0x8] sm:$0xff] 0.0
    $region29: #{tpu_custom_call.1} parent=1 // pred_fallthru
      _
    %v52 = vld [vmem:[#allocation2] sm:$0xff]
    %v53 = vld [vmem:[#allocation2 + $0x8] sm:$0xff]
    %v54 = vld [vmem:[#allocation3] sm:$0xff]
    %v55 = vld [vmem:[#allocation3 + $0x8] sm:$0xff]
    %v56 = vld [vmem:[#allocation3 + $0x10] sm:$0xff]
    %v57 = vld [vmem:[#allocation3 + $0x18] sm:$0xff]
    %v58 = vld [vmem:[#allocation3 + $0x20] sm:$0xff]
    %v59 = vld [vmem:[#allocation3 + $0x28] sm:$0xff]
    %v60 = vld [vmem:[#allocation3 + $0x30] sm:$0xff]
    %v61 = vld [vmem:[#allocation3 + $0x38] sm:$0xff]
    %v62 = vld [vmem:[#allocation3 + $0x40] sm:$0xff]
    %v63 = vld [vmem:[#allocation3 + $0x48] sm:$0xff]
    %v64 = vld [vmem:[#allocation3 + $0x50] sm:$0xff]
    %v65 = vld [vmem:[#allocation3 + $0x58] sm:$0xff]
    %v66 = vld [vmem:[#allocation3 + $0x60] sm:$0xff]
    %v67 = vld [vmem:[#allocation3 + $0x68] sm:$0xff]
    %v68 = vld [vmem:[#allocation3 + $0x70] sm:$0xff]
    %v69 = vld [vmem:[#allocation3 + $0x78] sm:$0xff]
    %v70 = vld [vmem:[#allocation3 + $0x80] sm:$0xff]
    %v71 = vld [vmem:[#allocation3 + $0x88] sm:$0xff]
    %v72 = vld [vmem:[#allocation3 + $0x90] sm:$0xff]
    %v73 = vld [vmem:[#allocation3 + $0x98] sm:$0xff]
    %v74 = vld [vmem:[#allocation3 + $0xa0] sm:$0xff]
    %v75 = vld [vmem:[#allocation3 + $0xa8] sm:$0xff]
    %v76 = vld [vmem:[#allocation3 + $0xb0] sm:$0xff]
    %v77 = vld [vmem:[#allocation3 + $0xb8] sm:$0xff]
    %v78 = vld [vmem:[#allocation3 + $0xc0] sm:$0xff]
    %v79 = vld [vmem:[#allocation3 + $0xc8] sm:$0xff]
    %v80 = vld [vmem:[#allocation3 + $0xd0] sm:$0xff]
    %v81 = vld [vmem:[#allocation3 + $0xd8] sm:$0xff]
    %v82 = vld [vmem:[#allocation3 + $0xe0] sm:$0xff]
    %v83 = vld [vmem:[#allocation3 + $0xe8] sm:$0xff]
    %v84 = vld [vmem:[#allocation3 + $0xf0] sm:$0xff]
    %v85 = vld [vmem:[#allocation3 + $0xf8] sm:$0xff]
    %v86 = vadd.f32 %v54, %v55
    %v87 = vrot.slane %v86, 4
    %v88 = vadd.f32 %v86, %v87
    %v89 = vrot.slane %v88, 2
    %v90 = vadd.f32 %v88, %v89
    %v91 = vrot.slane %v90, 1
    %v92 = vadd.f32 %v90, %v91
    %v93 = vadd.f32 %v56, %v57
    %v94 = vrot.slane %v93, 4
    %v95 = vadd.f32 %v93, %v94
    %v96 = vrot.slane %v95, 2
    %v97 = vadd.f32 %v95, %v96
    %v98 = vrot.slane %v97, 1
    %v99 = vadd.f32 %v97, %v98
    %v100 = vadd.f32 %v58, %v59
    %v101 = vrot.slane %v100, 4
    %v102 = vadd.f32 %v100, %v101
    %v103 = vrot.slane %v102, 2
    %v104 = vadd.f32 %v102, %v103
    %v105 = vrot.slane %v104, 1
    %v106 = vadd.f32 %v104, %v105
    %v107 = vadd.f32 %v60, %v61
    %v108 = vrot.slane %v107, 4
    %v109 = vadd.f32 %v107, %v108
    %v110 = vrot.slane %v109, 2
    %v111 = vadd.f32 %v109, %v110
    %v112 = vrot.slane %v111, 1
    %v113 = vadd.f32 %v111, %v112
    %v114 = vadd.f32 %v62, %v63
    %v115 = vrot.slane %v114, 4
    %v116 = vadd.f32 %v114, %v115
    %v117 = vrot.slane %v116, 2
    %v118 = vadd.f32 %v116, %v117
    %v119 = vrot.slane %v118, 1
    %v120 = vadd.f32 %v118, %v119
    %v121 = vadd.f32 %v64, %v65
    %v122 = vrot.slane %v121, 4
    %v123 = vadd.f32 %v121, %v122
    %v124 = vrot.slane %v123, 2
    %v125 = vadd.f32 %v123, %v124
    %v126 = vrot.slane %v125, 1
    %v127 = vadd.f32 %v125, %v126
    %v128 = vadd.f32 %v66, %v67
    %v129 = vrot.slane %v128, 4
    %v130 = vadd.f32 %v128, %v129
    %v131 = vrot.slane %v130, 2
    %v132 = vadd.f32 %v130, %v131
    %v133 = vrot.slane %v132, 1
    %v134 = vadd.f32 %v132, %v133
    %v135 = vadd.f32 %v68, %v69
    %v136 = vrot.slane %v135, 4
    %v137 = vadd.f32 %v135, %v136
    %v138 = vrot.slane %v137, 2
    %v139 = vadd.f32 %v137, %v138
    %v140 = vrot.slane %v139, 1
    %v141 = vadd.f32 %v139, %v140
    %v142 = vadd.f32 %v70, %v71
    %v143 = vrot.slane %v142, 4
    %v144 = vadd.f32 %v142, %v143
    %v145 = vrot.slane %v144, 2
    %v146 = vadd.f32 %v144, %v145
    %v147 = vrot.slane %v146, 1
    %v148 = vadd.f32 %v146, %v147
    %v149 = vadd.f32 %v72, %v73
    %v150 = vrot.slane %v149, 4
    %v151 = vadd.f32 %v149, %v150
    %v152 = vrot.slane %v151, 2
    %v153 = vadd.f32 %v151, %v152
    %v154 = vrot.slane %v153, 1
    %v155 = vadd.f32 %v153, %v154
    %v156 = vadd.f32 %v74, %v75
    %v157 = vrot.slane %v156, 4
    %v158 = vadd.f32 %v156, %v157
    %v159 = vrot.slane %v158, 2
    %v160 = vadd.f32 %v158, %v159
    %v161 = vrot.slane %v160, 1
    %v162 = vadd.f32 %v160, %v161
    %v163 = vadd.f32 %v76, %v77
    %v164 = vrot.slane %v163, 4
    %v165 = vadd.f32 %v163, %v164
    %v166 = vrot.slane %v165, 2
    %v167 = vadd.f32 %v165, %v166
    %v168 = vrot.slane %v167, 1
    %v169 = vadd.f32 %v167, %v168
    %v170 = vadd.f32 %v78, %v79
    %v171 = vrot.slane %v170, 4
    %v172 = vadd.f32 %v170, %v171
    %v173 = vrot.slane %v172, 2
    %v174 = vadd.f32 %v172, %v173
    %v175 = vrot.slane %v174, 1
    %v176 = vadd.f32 %v174, %v175
    %v177 = vadd.f32 %v80, %v81
    %v178 = vrot.slane %v177, 4
    %v179 = vadd.f32 %v177, %v178
    %v180 = vrot.slane %v179, 2
    %v181 = vadd.f32 %v179, %v180
    %v182 = vrot.slane %v181, 1
    %v183 = vadd.f32 %v181, %v182
    %v184 = vadd.f32 %v82, %v83
    %v185 = vrot.slane %v184, 4
    %v186 = vadd.f32 %v184, %v185
    %v187 = vrot.slane %v186, 2
    %v188 = vadd.f32 %v186, %v187
    %v189 = vrot.slane %v188, 1
    %v190 = vadd.f32 %v188, %v189
    %v191 = vadd.f32 %v84, %v85
    %v192 = vrot.slane %v191, 4
    %v193 = vadd.f32 %v191, %v192
    %v194 = vrot.slane %v193, 2
    %v195 = vadd.f32 %v193, %v194
    %v196 = vrot.slane %v195, 1
    %v197 = vadd.f32 %v195, %v196
    %vm214 = vcmask 1041409
    %v215 = vsel %vm214, %v99, %v92
    %vm216 = vcmask 1042434
    %v217 = vsel %vm216, %v106, %v215
    %vm218 = vcmask 1043459
    %v219 = vsel %vm218, %v113, %v217
    %vm220 = vcmask 1044484
    %v221 = vsel %vm220, %v120, %v219
    %vm222 = vcmask 1045509
    %v223 = vsel %vm222, %v127, %v221
    %vm224 = vcmask 1046534
    %v225 = vsel %vm224, %v134, %v223
    %vm226 = vcmask 1047559
    %v227 = vsel %vm226, %v141, %v225
    %v228 = vsel %vm214, %v155, %v148
    %v229 = vsel %vm216, %v162, %v228
    %v230 = vsel %vm218, %v169, %v229
    %v231 = vsel %vm220, %v176, %v230
    %v232 = vsel %vm222, %v183, %v231
    %v233 = vsel %vm224, %v190, %v232
    %v234 = vsel %vm226, %v197, %v233
    %v237 = vadd.f32 %v52, %v227
    %v238 = vadd.f32 %v53, %v234
    %239 = vst [vmem:[#allocation2] sm:$0xff] %v237
    %240 = vst [vmem:[#allocation2 + $0x8] sm:$0xff] %v238
    // Predicated region
    $region30: #{tpu_custom_call.1} parent=1 // pred_check
      %p241 = pneg %p46
    $region31: #{tpu_custom_call.1} parent=1 // pred_check_branch
      %243 = sbr.rel (%p241) target = $region33
    $region32: #{tpu_custom_call.1} parent=1 // pred_region
      %v244 = vld [vmem:[#allocation2] sm:$0xff]
      %v245 = vld [vmem:[#allocation2 + $0x8] sm:$0xff]
      %v246 = vld [vmem:[#allocation6] sm:$0xff]
      %v247 = vld [vmem:[#allocation6 + $0x8] sm:$0xff]
      %v248 = vld [vmem:[#allocation6 + $0x10] sm:$0xff]
      %v249 = vld [vmem:[#allocation6 + $0x18] sm:$0xff]
      %v250 = vld [vmem:[#allocation6 + $0x20] sm:$0xff]
      %v251 = vld [vmem:[#allocation6 + $0x28] sm:$0xff]
      %v252 = vld [vmem:[#allocation6 + $0x30] sm:$0xff]
      %v253 = vld [vmem:[#allocation6 + $0x38] sm:$0xff]
      %v254 = vld [vmem:[#allocation6 + $0x40] sm:$0xff]
      %v255 = vld [vmem:[#allocation6 + $0x48] sm:$0xff]
      %v256 = vld [vmem:[#allocation6 + $0x50] sm:$0xff]
      %v257 = vld [vmem:[#allocation6 + $0x58] sm:$0xff]
      %v258 = vld [vmem:[#allocation6 + $0x60] sm:$0xff]
      %v259 = vld [vmem:[#allocation6 + $0x68] sm:$0xff]
      %v260 = vld [vmem:[#allocation6 + $0x70] sm:$0xff]
      %v261 = vld [vmem:[#allocation6 + $0x78] sm:$0xff]
      %v262 = vld [vmem:[%s3] sm:$0x1]
      %v264 = vlaneseq
      %v265 = vshrl.u32 %v264, 7
      %v266 = vsub.s32 0, %v265
      %v267 = vrot.slane %v262, %v266
      %269 = vmatprep.subr.mxu0 0.0
      %270 = vmatpush1.msra.mxu0 %v261
      %271 = vmatprep.subr.mxu0 0.0
      %272 = vmatpush1.msra.mxu0 %v260
      %273 = vmatprep.subr.mxu0 0.0
      %274 = vmatpush1.msra.mxu0 %v259
      %275 = vmatprep.subr.mxu0 0.0
      %276 = vmatpush1.msra.mxu0 %v258
      %277 = vmatprep.subr.mxu0 0.0
      %278 = vmatpush1.msra.mxu0 %v257
      %279 = vmatprep.subr.mxu0 0.0
      %280 = vmatpush1.msra.mxu0 %v256
      %281 = vmatprep.subr.mxu0 0.0
      %282 = vmatpush1.msra.mxu0 %v255
      %283 = vmatprep.subr.mxu0 0.0
      %284 = vmatpush1.msra.mxu0 %v254
      %285 = vmatprep.subr.mxu0 0.0
      %286 = vmatpush1.msra.mxu0 %v253
      %287 = vmatprep.subr.mxu0 0.0
      %288 = vmatpush1.msra.mxu0 %v252
      %289 = vmatprep.subr.mxu0 0.0
      %290 = vmatpush1.msra.mxu0 %v251
      %291 = vmatprep.subr.mxu0 0.0
      %292 = vmatpush1.msra.mxu0 %v250
      %293 = vmatprep.subr.mxu0 0.0
      %294 = vmatpush1.msra.mxu0 %v249
      %295 = vmatprep.subr.mxu0 0.0
      %296 = vmatpush1.msra.mxu0 %v248
      %297 = vmatprep.subr.mxu0 0.0
      %298 = vmatpush1.msra.mxu0 %v247
      %299 = vmatprep.subr.mxu0 0.0
      %300 = vmatpush1.msra.mxu0 %v246
      %301 = vmatprep.subr.mxu0 0.0
      %302 = vmatpush2.msra.mxu0 0.0
      %303 = vmatprep.subr.mxu0 0.0
      %304 = vmatpush2.msra.mxu0 0.0
      %305 = vmatprep.subr.mxu0 0.0
      %306 = vmatpush2.msra.mxu0 0.0
      %307 = vmatprep.subr.mxu0 0.0
      %308 = vmatpush2.msra.mxu0 0.0
      %309 = vmatprep.subr.mxu0 0.0
      %310 = vmatpush2.msra.mxu0 0.0
      %311 = vmatprep.subr.mxu0 0.0
      %312 = vmatpush2.msra.mxu0 0.0
      %313 = vmatprep.subr.mxu0 0.0
      %314 = vmatpush2.msra.mxu0 0.0
      %315 = vmatprep.subr.mxu0 0.0
      %316 = vmatpush2.msra.mxu0 0.0
      %317 = vmatprep.subr.mxu0 0.0
      %318 = vmatpush2.msra.mxu0 0.0
      %319 = vmatprep.subr.mxu0 0.0
      %320 = vmatpush2.msra.mxu0 0.0
      %321 = vmatprep.subr.mxu0 0.0
      %322 = vmatpush2.msra.mxu0 0.0
      %323 = vmatprep.subr.mxu0 0.0
      %324 = vmatpush2.msra.mxu0 0.0
      %325 = vmatprep.subr.mxu0 0.0
      %326 = vmatpush2.msra.mxu0 0.0
      %327 = vmatprep.subr.mxu0 0.0
      %328 = vmatpush2.msra.mxu0 0.0
      %329 = vmatprep.subr.mxu0 0.0
      %330 = vmatpush2.msra.mxu0 0.0
      %331 = vmatprep.subr.mxu0 0.0
      %332 = vmatpush2.msra.mxu0 0.0
      %333 = vmatprep.mubr.f32.mxu0 0.0
      %334 = vmatmul.mubr.f32.gmra.mxu0 %v244
      %v335 = vpop.f32.mrf.mxu0
      %v336 = vadd.f32 %v267, %v335
      %v337 = vpop.f32.mrf.mxu0
      %338 = vmatprep.mubr.f32.mxu0 0.0
      %339 = vmatmul.mubr.f32.gmra.mxu0 %v245
      %v340 = vpop.f32.mrf.mxu0
      %v341 = vadd.f32 %v267, %v340
      %v342 = vpop.f32.mrf.mxu0
      %343 = vdwg.mxu0
      %344 = vmax.xlane.f32.xlu0 %v336
      %v345 = vpop.xlane.xlu0 %344
      %346 = vmax.xlane.f32.xlu0 %v341
      %v347 = vpop.xlane.xlu0 %346
      %v348 = vsub.f32 %v336, %v345
      %v349 = vsub.f32 %v341, %v347
      %v350 = vmul.f32 %v348, 1.442695
      %v351 = vpow.pop %v350
      %v352 = vmul.f32 %v349, 1.442695
      %v353 = vpow.pop %v352
      %354 = vadd.xlane.f32.xlu0 %v351
      %v355 = vpop.xlane.xlu0 %354
      %356 = vadd.xlane.f32.xlu0 %v353
      %v357 = vpop.xlane.xlu0 %356
      %v358 = vlog2.pop %v355
      %v359 = vmul.f32 %v358, 0.6931472
      %v360 = vlog2.pop %v357
      %v361 = vmul.f32 %v360, 0.6931472
      %v362 = vadd.f32 %v359, %v345
      %v363 = vadd.f32 %v361, %v347
      %v364 = vld [vmem:[%s1] sm:$0xff]
      %v365 = vld [vmem:[%s1 + $0x8] sm:$0xff]
      %v366 = vlaneseq
      %v367 = vand.u32 %v366, 127
      %368 = vset.pattern.permute.xlu0 0
      %369 = vperm.xlu0 %368, %v364
      %v370 = vpop.permute.xlu0 %369
      %371 = vset.pattern.permute.xlu0 0
      %372 = vperm.xlu0 %371, %v365
      %v373 = vpop.permute.xlu0 %372
      %vm374 = vcmp.eq.s32.totalorder %v367, %v370
      %vm375 = vcmp.eq.s32.totalorder %v367, %v373
      %v376 = vsel %vm374, 1, 0
      %v377 = vsel %vm375, 1, 0
      %v378 = vcvt.s32.f32 %v376
      %v379 = vcvt.s32.f32 %v377
      %v380 = vmul.f32 %v336, %v378
      %v381 = vmul.f32 %v341, %v379
      %382 = vadd.xlane.f32.xlu0 %v380
      %v383 = vpop.xlane.xlu0 %382
      %384 = vadd.xlane.f32.xlu0 %v381
      %v385 = vpop.xlane.xlu0 %384
      %v386 = vsub.f32 %v362, %v383
      %v387 = vsub.f32 %v363, %v385
      %s388 = smul.u32 0, 16
      %v389 = vlaneseq
      %v390 = vshrl.u32 %v389, 7
      %v391 = vadd.s32 %v390, 8
      %v392 = vstv %s388
      %v393 = vadd.s32 %v392, %v390
      %v394 = vadd.s32 %v392, %v391
      %vm395 = vcmp.lt.s32.totalorder %v393, 13
      %vm396 = vcmp.lt.s32.totalorder %v394, 13
      %v397 = vsel %vm395, %v386, 0.0
      %v398 = vsel %vm396, %v387, 0.0
      %vm399 = vcmask 7168
      %v400 = vsel %vm399, %v397, 0.0
      %v401 = vsel %vm399, %v398, 0.0
      %v402 = vadd.f32 %v400, %v401
      %403 = vadd.xlane.f32.xlu0 %v402
      %v404 = vpop.xlane.xlu0 %403
      %v405 = vrot.slane %v404, 4
      %v406 = vadd.f32 %v404, %v405
      %v407 = vrot.slane %v406, 2
      %v408 = vadd.f32 %v406, %v407
      %v409 = vrot.slane %v408, 1
      %v410 = vadd.f32 %v408, %v409
      %s411 = vtos %v410
      %v412 = vstv %s411
      %413 = vst [vmem:[#allocation8] sm:$0xff] %v412
    $region33: #{tpu_custom_call.1} parent=1 // pred_fallthru
      _
    // Predicated region
    $region34: #{tpu_custom_call.1} parent=1 // pred_check
      _
    $region35: #{tpu_custom_call.1} parent=1 // pred_check_branch
      %415 = sbr.rel (0) target = $region37
    $region36: #{tpu_custom_call.1} parent=1 // pred_region
      %s417 = ssub.s32 128, 128
      %418 = vsyncadd [#allocation5], %s417
      %s420 = sshll.u32 [#allocation8], 4
      %s421 = int_to_ptr.vmem [resolvable:$true] %s420
      %423 = dma.vmem_to_hbm [thread:$0]  %s421, 128, %s4, [#allocation5]
    $region37: #{tpu_custom_call.1} parent=1 // pred_fallthru
      _
    // Predicated region
    $region38: #{tpu_custom_call.1} parent=1 // pred_check
      _
    $region39: #{tpu_custom_call.1} parent=1 // pred_check_branch
      %425 = sbr.rel (0) target = $region41
    $region40: #{tpu_custom_call.1} parent=1 // pred_region
      %426 = dma.done [#allocation5], 128
    $region41: #{tpu_custom_call.1} parent=1 // pred_fallthru
      _
    %427 = vsyncpa [#allocation4], 1
    %428 = vsyncpa [#allocation7], 1
    %429 = vsyncpa [#allocation5], 1

</llo_original>
